<compile_context>
chip_gen: v7x
topology: tpu7x:2x2x1
jax: 0.10.0
libtpu: 0.0.40
codegen_flags: <defaults>
</compile_context>

<pallas_src>
import functools
import math

import jax
import jax.numpy as jnp
from jax import lax
from jax.experimental import pallas as pl
from jax.experimental.pallas import tpu as pltpu


def _attention_kernel(x_ref, wqkv_ref, bqkv_ref, o_ref, *, num_heads, scale,
                      mxu_dtype, approx_recip):
    """One program = one batch element; all heads computed together."""
    x = x_ref[0]                      # (S, D_in)
    w = wqkv_ref[...]                 # (D_in, 3*D_out)  == [Wq.T | Wk.T | Wv.T]
    b = bqkv_ref[...]                 # (1, 3*D_out), kept f32

    if mxu_dtype is not None:
        x = x.astype(mxu_dtype)
        w = w.astype(mxu_dtype)

    # Fused QKV projection: one wide MXU matmul (N = 3*D_out), f32 accumulate.
    qkv = jnp.dot(x, w, preferred_element_type=jnp.float32) + b   # (S, 3*D_out)

    s_len = qkv.shape[0]
    d_out = qkv.shape[1] // 3
    head_dim = d_out // num_heads

    # Fold 1/sqrt(head_dim) into q instead of scaling the (S, S) score matrix.
    q = qkv[:, 0 * d_out:1 * d_out] * scale
    k = qkv[:, 1 * d_out:2 * d_out]
    v = qkv[:, 2 * d_out:3 * d_out]

    # Per-head attention; num_heads is a compile-time constant so this
    # unrolls into 2-D MXU ops only (no 3-D transposes needed).
    out_heads = []
    for h in range(num_heads):
        lo = h * head_dim
        hi = lo + head_dim
        qh = q[:, lo:hi]              # (S, hd)
        kh = k[:, lo:hi]
        vh = v[:, lo:hi]

        if mxu_dtype is not None:
            qh = qh.astype(mxu_dtype)
            kh = kh.astype(mxu_dtype)

        # (S, S) scores: contract head_dim of q with head_dim of k directly
        # (trans_b) — no explicit kh.T is materialized.
        scores = lax.dot_general(
            qh, kh, dimension_numbers=(((1,), (1,)), ((), ())),
            preferred_element_type=jnp.float32)

        # Numerically-stable softmax over keys (matches softmax_func).
        m = jnp.max(scores, axis=-1, keepdims=True)
        e = jnp.exp(scores - m)
        denom = jnp.sum(e, axis=-1, keepdims=True)
        if approx_recip:
            p = e * pl.reciprocal(denom, approx=True)   # divide -> EUP slot
        else:
            p = e / denom                               # exact f32 semantics

        if mxu_dtype is not None:
            p = p.astype(mxu_dtype)
            vh = vh.astype(mxu_dtype)

        out_heads.append(
            jnp.dot(p, vh, preferred_element_type=jnp.float32))    # (S, hd)

    # Merge heads in-kernel -> one lane-dense (S, D_out) store.
    out = jnp.concatenate(out_heads, axis=-1)
    o_ref[0] = out.astype(o_ref.dtype)


def attention_module_forward(x, wq, wk, wv, bq, bk, bv, num_heads, *,
                             mxu_dtype=None, approx_softmax_recip=None):
    """x: [B, S, D_in]; w*: torch-layout [D_out, D_in]; b*: [D_out].

    mxu_dtype: optionally cast matmul operands (e.g. jnp.bfloat16 on v6e/v7x);
      accumulation and softmax math stay f32.
    approx_softmax_recip: use the EUP approximate reciprocal for the softmax
      denominator; defaults to True only on the reduced-precision path so the
      precise path keeps the module's f32 semantics.
    """
    if approx_softmax_recip is None:
        approx_softmax_recip = mxu_dtype is not None

    B, S, D_in = x.shape
    D_out = wq.shape[0]
    assert D_out % num_heads == 0
    head_dim = D_out // num_heads
    scale = 1.0 / math.sqrt(head_dim)

    # Single concatenated transpose-weight [D_in, 3*D_out] and bias [1, 3*D_out]:
    # one weight DMA per grid step, no per-head re-layout.
    wqkv = jnp.concatenate([wq.T, wk.T, wv.T], axis=1)
    bqkv = jnp.concatenate([bq, bk, bv]).reshape(1, 3 * D_out)

    kernel = functools.partial(
        _attention_kernel, num_heads=num_heads, scale=scale,
        mxu_dtype=mxu_dtype, approx_recip=approx_softmax_recip)

    # TODO(synk): for large S (H*W >~ 1k) the full (S, S) score block no longer
    # fits comfortably in v7x's 64 MiB VMEM; tile the query axis and loop KV
    # flash-style with an f32 accumulator scratch instead of materializing it.
    return pl.pallas_call(
        kernel,
        out_shape=jax.ShapeDtypeStruct((B, S, D_out), x.dtype),
        grid_spec=pltpu.PrefetchScalarGridSpec(
            num_scalar_prefetch=0,
            grid=(B,),
            in_specs=[
                pl.BlockSpec((1, S, D_in), lambda b: (b, 0, 0)),
                pl.BlockSpec((D_in, 3 * D_out), lambda b: (0, 0)),
                pl.BlockSpec((1, 3 * D_out), lambda b: (0, 0)),
            ],
            out_specs=pl.BlockSpec((1, S, D_out), lambda b: (b, 0, 0)),
        ),
        compiler_params=pltpu.CompilerParams(
            # Batch axis stays "parallel" so v7x's 2 TensorCores both get work;
            # raise scoped VMEM above v5e's 16 MiB default for larger blocks.
            dimension_semantics=("parallel",),
            vmem_limit_bytes=32 * 1024 * 1024,
        ),
    )(x, wqkv, bqkv)


def _reference(x, wq, wk, wv, bq, bk, bv, num_heads):
    """Pure-JAX reference mirroring the PyTorch forward."""
    B, S, D_in = x.shape
    D_out = wq.shape[0]
    hd = D_out // num_heads

    def lin(w, b):
        return x @ w.T + b

    def split(t):  # [B,S,D_out] -> [B,H,S,hd]
        return jnp.transpose(t.reshape(B, S, num_heads, hd), (0, 2, 1, 3))

    q, k, v = split(lin(wq, bq)), split(lin(wk, bk)), split(lin(wv, bv))
    scores = jnp.einsum("bhqd,bhkd->bhqk", q, k) / jnp.sqrt(jnp.float32(hd))
    scores = scores - jnp.max(scores, axis=-1, keepdims=True)
    e = jnp.exp(scores)
    p = e / jnp.sum(e, axis=-1, keepdims=True)
    o = jnp.einsum("bhqk,bhkd->bhqd", p, v)
    return jnp.transpose(o, (0, 2, 1, 3)).reshape(B, S, D_out)


if __name__ == "__main__":
    # Small shapes consistent with the module: B=2 classes, S=8 (H*W), D=32.
    B, S, D_in, D_out, num_heads = 2, 8, 32, 32, 2

    key = jax.random.PRNGKey(0)
    kx, kwq, kwk, kwv, kbq, kbk, kbv = jax.random.split(key, 7)

    x = jax.random.normal(kx, (B, S, D_in), dtype=jnp.float32)

    # Deterministic "xavier_normal_" weights (std = sqrt(2/(fan_in+fan_out)))
    # and normal biases, as in init_mode='random'.
    xavier_std = math.sqrt(2.0 / (D_in + D_out))
    wq = xavier_std * jax.random.normal(kwq, (D_out, D_in), dtype=jnp.float32)
    wk = xavier_std * jax.random.normal(kwk, (D_out, D_in), dtype=jnp.float32)
    wv = xavier_std * jax.random.normal(kwv, (D_out, D_in), dtype=jnp.float32)
    bq = jax.random.normal(kbq, (D_out,), dtype=jnp.float32)
    bk = jax.random.normal(kbk, (D_out,), dtype=jnp.float32)
    bv = jax.random.normal(kbv, (D_out,), dtype=jnp.float32)

    ref = _reference(x, wq, wk, wv, bq, bk, bv, num_heads)

    # Precise path (f32 MXU, exact softmax) — matches the module closely.
    out = attention_module_forward(x, wq, wk, wv, bq, bk, bv, num_heads)
    out = jax.block_until_ready(out)
    assert out.shape == (B, S, D_out)
    assert jnp.allclose(out, ref, atol=1e-4, rtol=1e-4), "precise path mismatch"

    # Fast path (bf16 MXU operands, f32 accumulate, approx softmax reciprocal)
    # — the v6e/v7x-recommended configuration; looser tolerance by design.
    out_fast = attention_module_forward(x, wq, wk, wv, bq, bk, bv, num_heads,
                                        mxu_dtype=jnp.bfloat16)
    out_fast = jax.block_until_ready(out_fast)
    assert out_fast.shape == (B, S, D_out)
    assert jnp.allclose(out_fast, ref, atol=1e-1, rtol=1e-1), "fast path mismatch"

    print("KERNEL_OK")
</pallas_src>

<mosaic_0001>
module attributes {stable_mosaic.version = 11 : i64} {
  func.func @_attention_kernel(%arg0: i32, %arg1: memref<1x8x32xf32, #tpu.memory_space<vmem>>, %arg2: memref<32x96xf32, #tpu.memory_space<vmem>>, %arg3: memref<1x96xf32, #tpu.memory_space<vmem>>, %arg4: memref<1x8x32xf32, #tpu.memory_space<vmem>>) attributes {dimension_semantics = [#tpu.dimension_semantics<parallel>], iteration_bounds = array<i64: 2>, scalar_prefetch = 0 : i64, scratch_operands = 0 : i64, tpu.core_type = #tpu.core_type<tc>, window_params = [{transform_indices = @transform_0, window_bounds = array<i64: 1, 8, 32>}, {pipeline_mode = #tpu.pipeline_mode<synchronous>, transform_indices = @transform_1, window_bounds = array<i64: 32, 96>}, {pipeline_mode = #tpu.pipeline_mode<synchronous>, transform_indices = @transform_2, window_bounds = array<i64: 1, 96>}, {transform_indices = @transform_3, window_bounds = array<i64: 1, 8, 32>}]} {
    %c0 = arith.constant 0 : index
    %c0_0 = arith.constant 0 : index
    %c0_1 = arith.constant 0 : index
    %0 = vector.load %arg1[%c0, %c0_0, %c0_1] : memref<1x8x32xf32, #tpu.memory_space<vmem>>, vector<1x8x32xf32>
    %1 = vector.shape_cast %0 : vector<1x8x32xf32> to vector<8x32xf32>
    %c0_2 = arith.constant 0 : index
    %c0_3 = arith.constant 0 : index
    %2 = vector.load %arg2[%c0_2, %c0_3] : memref<32x96xf32, #tpu.memory_space<vmem>>, vector<32x96xf32>
    %c0_4 = arith.constant 0 : index
    %c0_5 = arith.constant 0 : index
    %3 = vector.load %arg3[%c0_4, %c0_5] : memref<1x96xf32, #tpu.memory_space<vmem>>, vector<1x96xf32>
    %cst = arith.constant dense<0.000000e+00> : vector<8x96xf32>
    %4 = tpu.matmul %1, %2, %cst {dimension_numbers = #tpu.dot_dimension_numbers<[1], [0], [0], [1], [0, 0, 1, 1], [], []>} : vector<8x32xf32>, vector<32x96xf32>, vector<8x96xf32> -> vector<8x96xf32>
    %5 = vector.broadcast %3 : vector<1x96xf32> to vector<8x96xf32>
    %6 = arith.addf %4, %5 : vector<8x96xf32>
    %7 = vector.extract_strided_slice %6 {offsets = [0, 0], sizes = [8, 32], strides = [1, 1]} : vector<8x96xf32> to vector<8x32xf32>
    %cst_6 = arith.constant 2.500000e-01 : f32
    %8 = vector.broadcast %cst_6 : f32 to vector<8x32xf32>
    %9 = arith.mulf %7, %8 : vector<8x32xf32>
    %10 = vector.extract_strided_slice %6 {offsets = [0, 32], sizes = [8, 32], strides = [1, 1]} : vector<8x96xf32> to vector<8x32xf32>
    %11 = vector.extract_strided_slice %6 {offsets = [0, 64], sizes = [8, 32], strides = [1, 1]} : vector<8x96xf32> to vector<8x32xf32>
    %12 = vector.extract_strided_slice %9 {offsets = [0, 0], sizes = [8, 16], strides = [1, 1]} : vector<8x32xf32> to vector<8x16xf32>
    %13 = vector.extract_strided_slice %10 {offsets = [0, 0], sizes = [8, 16], strides = [1, 1]} : vector<8x32xf32> to vector<8x16xf32>
    %14 = vector.extract_strided_slice %11 {offsets = [0, 0], sizes = [8, 16], strides = [1, 1]} : vector<8x32xf32> to vector<8x16xf32>
    %cst_7 = arith.constant dense<0.000000e+00> : vector<8x8xf32>
    %15 = tpu.matmul %12, %13, %cst_7 {dimension_numbers = #tpu.dot_dimension_numbers<[1], [1], [0], [0], [0, 0, 1, 0], [], []>} : vector<8x16xf32>, vector<8x16xf32>, vector<8x8xf32> -> vector<8x8xf32>
    %cst_8 = arith.constant dense<0xFF800000> : vector<8xf32>
    %16 = vector.multi_reduction <maximumf>, %15, %cst_8 [1] : vector<8x8xf32> to vector<8xf32>
    %17 = vector.shape_cast %16 : vector<8xf32> to vector<8x1xf32>
    %18 = vector.broadcast %17 : vector<8x1xf32> to vector<8x8xf32>
    %19 = arith.subf %15, %18 : vector<8x8xf32>
    %20 = math.exp %19 : vector<8x8xf32>
    %cst_9 = arith.constant dense<0.000000e+00> : vector<8xf32>
    %21 = vector.multi_reduction <add>, %20, %cst_9 [1] : vector<8x8xf32> to vector<8xf32>
    %22 = vector.shape_cast %21 : vector<8xf32> to vector<8x1xf32>
    %23 = vector.broadcast %22 : vector<8x1xf32> to vector<8x8xf32>
    %24 = arith.divf %20, %23 : vector<8x8xf32>
    %cst_10 = arith.constant dense<0.000000e+00> : vector<8x16xf32>
    %25 = tpu.matmul %24, %14, %cst_10 {dimension_numbers = #tpu.dot_dimension_numbers<[1], [0], [0], [1], [0, 0, 1, 1], [], []>} : vector<8x8xf32>, vector<8x16xf32>, vector<8x16xf32> -> vector<8x16xf32>
    %26 = vector.extract_strided_slice %9 {offsets = [0, 16], sizes = [8, 16], strides = [1, 1]} : vector<8x32xf32> to vector<8x16xf32>
    %27 = vector.extract_strided_slice %10 {offsets = [0, 16], sizes = [8, 16], strides = [1, 1]} : vector<8x32xf32> to vector<8x16xf32>
    %28 = vector.extract_strided_slice %11 {offsets = [0, 16], sizes = [8, 16], strides = [1, 1]} : vector<8x32xf32> to vector<8x16xf32>
    %cst_11 = arith.constant dense<0.000000e+00> : vector<8x8xf32>
    %29 = tpu.matmul %26, %27, %cst_11 {dimension_numbers = #tpu.dot_dimension_numbers<[1], [1], [0], [0], [0, 0, 1, 0], [], []>} : vector<8x16xf32>, vector<8x16xf32>, vector<8x8xf32> -> vector<8x8xf32>
    %cst_12 = arith.constant dense<0xFF800000> : vector<8xf32>
    %30 = vector.multi_reduction <maximumf>, %29, %cst_12 [1] : vector<8x8xf32> to vector<8xf32>
    %31 = vector.shape_cast %30 : vector<8xf32> to vector<8x1xf32>
    %32 = vector.broadcast %31 : vector<8x1xf32> to vector<8x8xf32>
    %33 = arith.subf %29, %32 : vector<8x8xf32>
    %34 = math.exp %33 : vector<8x8xf32>
    %cst_13 = arith.constant dense<0.000000e+00> : vector<8xf32>
    %35 = vector.multi_reduction <add>, %34, %cst_13 [1] : vector<8x8xf32> to vector<8xf32>
    %36 = vector.shape_cast %35 : vector<8xf32> to vector<8x1xf32>
    %37 = vector.broadcast %36 : vector<8x1xf32> to vector<8x8xf32>
    %38 = arith.divf %34, %37 : vector<8x8xf32>
    %cst_14 = arith.constant dense<0.000000e+00> : vector<8x16xf32>
    %39 = tpu.matmul %38, %28, %cst_14 {dimension_numbers = #tpu.dot_dimension_numbers<[1], [0], [0], [1], [0, 0, 1, 1], [], []>} : vector<8x8xf32>, vector<8x16xf32>, vector<8x16xf32> -> vector<8x16xf32>
    %40 = tpu.concatenate %25, %39 in 1 : vector<8x16xf32>, vector<8x16xf32> -> vector<8x32xf32>
    %c0_15 = arith.constant 0 : index
    %c0_16 = arith.constant 0 : index
    %c0_17 = arith.constant 0 : index
    %41 = vector.load %arg4[%c0_15, %c0_16, %c0_17] : memref<1x8x32xf32, #tpu.memory_space<vmem>>, vector<1x8x32xf32>
    %42 = vector.shape_cast %41 : vector<1x8x32xf32> to vector<8x32xf32>
    %43 = vector.shape_cast %40 : vector<8x32xf32> to vector<1x8x32xf32>
    tpu.vector_store %arg4[%c0_15, %c0_16, %c0_17], %43 {strides = array<i32>} : memref<1x8x32xf32, #tpu.memory_space<vmem>>, vector<1x8x32xf32>,
    return
  }
  func.func @transform_0(%arg0: i32) -> (i32, i32, i32) {
    %c0_i32 = arith.constant 0 : i32
    %c0_i32_0 = arith.constant 0 : i32
    %c0_i32_1 = arith.constant 0 : i32
    return %arg0, %c0_i32, %c0_i32_0 : i32, i32, i32
  }
  func.func @transform_1(%arg0: i32) -> (i32, i32) {
    %c0_i32 = arith.constant 0 : i32
    %c0_i32_0 = arith.constant 0 : i32
    %c0_i32_1 = arith.constant 0 : i32
    return %c0_i32, %c0_i32_0 : i32, i32
  }
  func.func @transform_2(%arg0: i32) -> (i32, i32) {
    %c0_i32 = arith.constant 0 : i32
    %c0_i32_0 = arith.constant 0 : i32
    %c0_i32_1 = arith.constant 0 : i32
    return %c0_i32, %c0_i32_0 : i32, i32
  }
  func.func @transform_3(%arg0: i32) -> (i32, i32, i32) {
    %c0_i32 = arith.constant 0 : i32
    %c0_i32_0 = arith.constant 0 : i32
    %c0_i32_1 = arith.constant 0 : i32
    return %arg0, %c0_i32, %c0_i32_0 : i32, i32, i32
  }
}

</mosaic_0001>

<llo_original>
// kernel: tpu_custom_call.1
$region0: #{tpu_custom_call.1}
  #allocation0 [shape = 'u32[]', space=smem, size = 0x4, offset = 0x4, fixed_abs, tag = 'smem constant byte address 0x4 - core index']
  #allocation1 [shape = 'u32[144,128]{1,0:T(1,128)}', space=vmem, size = 0x12000, scoped, tag = 'internal scratch']
  %s0 = inlined_call_operand.hbm [shape: f32[2,8,32], index: 0, kind: input, shape index: {}]
  %s1 = inlined_call_operand.hbm [shape: f32[32,96], index: 1, kind: input, shape index: {}]
  %s2 = inlined_call_operand.vmem [shape: f32[1,96], index: 2, kind: input, shape index: {}]
  %s3 = inlined_call_operand.hbm [shape: f32[2,8,32], index: 3, kind: output, shape index: {}]
  %s4 = sld [smem:[#allocation0]]
  $region53: #{tpu_custom_call.1} parent=0
    _
  %s6 = ssub.s32 1, %s4
  %s7 = scalar_select 0, %s6, %s4
  $region1: #{tpu_custom_call.1} parent=0
    #allocation2 [shape = 'u8[8192]{0}', space=vmem, size = 0x2000, scoped, tag = 'input window, operand 0']
    #allocation3 [shape = 's32[2]{0}', space=sflag, size = 0x8, scoped, tag = 'scoped memory for tpu_custom_call.1']
    #allocation4 [shape = 's32[2]{0}', space=sflag, size = 0x8, scoped, tag = 'scoped memory for tpu_custom_call.1']
    #allocation5 [shape = 'u8[16384]{0}', space=vmem, size = 0x4000, scoped, tag = 'input window, operand 1, single buffered']
    #allocation6 [shape = 's32[1]{0}', space=sflag, size = 0x4, scoped, tag = 'scoped memory for tpu_custom_call.1']
    #allocation7 [shape = 'u8[8192]{0}', space=vmem, size = 0x2000, scoped, tag = 'output window, operand 0']
    %8 = vsyncpa [#allocation3], 0
    %s9 = scalar_lea.sflag [#allocation3], 1
    %10 = vsyncpa %s9, 0
    %11 = vsyncpa [#allocation6], 0
    %12 = vsyncpa [#allocation4], 0
    %s13 = scalar_lea.sflag [#allocation4], 1
    %14 = vsyncpa %s13, 0
    loop: start=0, step=1, limit=4
    $region2: #{tpu_custom_call.1} parent=1 // loop_pre_header
      _
    $region3: #{tpu_custom_call.1} parent=1 // loop_header
      %s16 = sphi 0, %s20
      %p17 = scmp.ge.s32.totalorder %s16, 4
      %s26 = sphi 0, %s28
      %s29 = sphi 0, %s26
      %s30 = sphi 0, %s29
      %s46 = sphi 0, %s30
      %s50 = sphi 0, %s50
      %s52 = sphi 0, %s50
      %s53 = sphi 0, %s52
      %s67 = sphi 0, %s53
      %s71 = sphi 0, %s71
      %s73 = sphi 0, %s71
      %s74 = sphi 0, %s73
      %s88 = sphi 0, %s74
      %s94 = sphi 0, %s96
      %s97 = sphi 0, %s94
      %s98 = sphi 0, %s97
      %s114 = sphi 0, %s98
    $region4: #{tpu_custom_call.1} parent=1 // loop_header_branch
      %19 = sbr.rel (%p17) target = $region8
    $region5: #{tpu_custom_call.1} parent=1 // loop_body
      %s21 = ssub.s32 %s16, 1
      %s22 = ssub.s32 %s16, 2
      %s23 = sadd.s32 %s16, 1
      %s24 = ssub.s32 %s16, %s23
      %p25 = scmp.eq.s32.totalorder %s24, 0
      %s27 = sadd.s32 %s26, 1
      %s28 = scalar_select %p25, %s26, %s27
      %p31 = pneg %p25
      %p32 = scmp.eq.s32.totalorder %s16, 1
      %p33 = por %p31, %p32
      %p34 = scmp.ne.s32.totalorder %s26, %s29
      %p35 = scmp.eq.s32.totalorder %s16, 0
      %p36 = por %p34, %p35
      %p37 = scmp.ne.s32.totalorder %s26, %s29
      %p38 = scmp.eq.s32.totalorder %s21, 1
      %p39 = por %p37, %p38
      %p40 = scmp.ne.s32.totalorder %s29, %s30
      %p41 = scmp.eq.s32.totalorder %s21, 0
      %p42 = por %p40, %p41
      %p43 = scmp.ne.s32.totalorder %s29, %s30
      %p44 = scmp.eq.s32.totalorder %s22, 1
      %p45 = por %p43, %p44
      %p47 = scmp.ne.s32.totalorder %s30, %s46
      %p48 = scmp.eq.s32.totalorder %s22, 0
      %p49 = por %p47, %p48
      %s51 = sadd.s32 %s50, 1
      %p54 = scmp.eq.s32.totalorder %s16, 1
      %p55 = scmp.ne.s32.totalorder %s50, %s52
      %p56 = scmp.eq.s32.totalorder %s16, 0
      %p57 = por %p55, %p56
      %p58 = scmp.ne.s32.totalorder %s50, %s52
      %p59 = scmp.eq.s32.totalorder %s21, 1
      %p60 = por %p58, %p59
      %p61 = scmp.ne.s32.totalorder %s52, %s53
      %p62 = scmp.eq.s32.totalorder %s21, 0
      %p63 = por %p61, %p62
      %p64 = scmp.ne.s32.totalorder %s52, %s53
      %p65 = scmp.eq.s32.totalorder %s22, 1
      %p66 = por %p64, %p65
      %p68 = scmp.ne.s32.totalorder %s53, %s67
      %p69 = scmp.eq.s32.totalorder %s22, 0
      %p70 = por %p68, %p69
      %s72 = sadd.s32 %s71, 1
      %p75 = scmp.eq.s32.totalorder %s16, 1
      %p76 = scmp.ne.s32.totalorder %s71, %s73
      %p77 = scmp.eq.s32.totalorder %s16, 0
      %p78 = por %p76, %p77
      %p79 = scmp.ne.s32.totalorder %s71, %s73
      %p80 = scmp.eq.s32.totalorder %s21, 1
      %p81 = por %p79, %p80
      %p82 = scmp.ne.s32.totalorder %s73, %s74
      %p83 = scmp.eq.s32.totalorder %s21, 0
      %p84 = por %p82, %p83
      %p85 = scmp.ne.s32.totalorder %s73, %s74
      %p86 = scmp.eq.s32.totalorder %s22, 1
      %p87 = por %p85, %p86
      %p89 = scmp.ne.s32.totalorder %s74, %s88
      %p90 = scmp.eq.s32.totalorder %s22, 0
      %p91 = por %p89, %p90
      %s92 = ssub.s32 %s16, %s23
      %p93 = scmp.eq.s32.totalorder %s92, 0
      %s95 = sadd.s32 %s94, 1
      %s96 = scalar_select %p93, %s94, %s95
      %p99 = pneg %p93
      %p100 = scmp.eq.s32.totalorder %s16, 1
      %p101 = por %p99, %p100
      %p102 = scmp.ne.s32.totalorder %s94, %s97
      %p103 = scmp.eq.s32.totalorder %s16, 0
      %p104 = por %p102, %p103
      %p105 = scmp.ne.s32.totalorder %s94, %s97
      %p106 = scmp.eq.s32.totalorder %s21, 1
      %p107 = por %p105, %p106
      %p108 = scmp.ne.s32.totalorder %s97, %s98
      %p109 = scmp.eq.s32.totalorder %s21, 0
      %p110 = por %p108, %p109
      %p111 = scmp.ne.s32.totalorder %s97, %s98
      %p112 = scmp.eq.s32.totalorder %s22, 1
      %p113 = por %p111, %p112
      %p115 = scmp.ne.s32.totalorder %s98, %s114
      %p116 = scmp.eq.s32.totalorder %s22, 0
      %p117 = por %p115, %p116
      %p118 = scmp.le.s32.totalorder 1, %s16
      %p119 = scmp.lt.s32.totalorder %s16, 3
      %p120 = pnand %p118, %p119
      %p121 = pneg %p120
      // Predicated region
      $region9: #{tpu_custom_call.1} parent=5 // pred_check
        _
      $region10: #{tpu_custom_call.1} parent=5 // pred_check_branch
        %123 = sbr.rel (%p120) target = $region12
      $region11: #{tpu_custom_call.1} parent=5 // pred_region
        %s124 = ssub.s32 %s16, 1
        // Predicated region
        $region13: #{tpu_custom_call.1} parent=11 // pred_check
          %p125 = pneg %p63
        $region14: #{tpu_custom_call.1} parent=11 // pred_check_branch
          %127 = sbr.rel (%p125) target = $region16
        $region15: #{tpu_custom_call.1} parent=11 // pred_region
          %s129 = ssub.s32 512, 512
          %130 = vsyncadd [#allocation6], %s129
          %s131 = sshll.u32 [#allocation5], 4
          %s132 = int_to_ptr.vmem [resolvable:$true] %s131
          %137 = dma.hbm_to_vmem [thread:$0]  %s1, 512, %s132, [#allocation6], 128, 128, 8
        $region16: #{tpu_custom_call.1} parent=11 // pred_fallthru
          _
        // Predicated region
        $region17: #{tpu_custom_call.1} parent=11 // pred_check
          %p138 = pneg %p84
        $region18: #{tpu_custom_call.1} parent=11 // pred_check_branch
          %140 = sbr.rel (%p138) target = $region20
        $region19: #{tpu_custom_call.1} parent=11 // pred_region
          _
        $region20: #{tpu_custom_call.1} parent=11 // pred_fallthru
          _
      $region12: #{tpu_custom_call.1} parent=5 // pred_fallthru
        _
      %p141 = scmp.lt.s32.totalorder %s16, 2
      // Predicated region
      $region21: #{tpu_custom_call.1} parent=5 // pred_check
        %p142 = pneg %p141
      $region22: #{tpu_custom_call.1} parent=5 // pred_check_branch
        %144 = sbr.rel (%p142) target = $region24
      $region23: #{tpu_custom_call.1} parent=5 // pred_region
        // Predicated region
        $region25: #{tpu_custom_call.1} parent=23 // pred_check
          %p145 = pneg %p36
        $region26: #{tpu_custom_call.1} parent=23 // pred_check_branch
          %147 = sbr.rel (%p145) target = $region28
        $region27: #{tpu_custom_call.1} parent=23 // pred_region
          %s148 = sand.u32 %s26, 1
          %s149 = scalar_lea.sflag [#allocation3], %s148
          %s150 = sand.u32 %s26, 1
          %s151 = smul.addr %s150, 8
          %s152 = scalar_lea.vmem [#allocation2], %s151
          %s154 = ssub.s32 128, 128
          %155 = vsyncadd %s149, %s154
          %s156 = smul.addr %s16, 128
          %s157 = scalar_lea.hbm %s0, %s156
          %s159 = sshll.u32 %s152, 4
          %s160 = int_to_ptr.vmem [resolvable:$true] %s159
          %162 = dma.hbm_to_vmem [thread:$0]  %s157, 128, %s160, %s149
        $region28: #{tpu_custom_call.1} parent=23 // pred_fallthru
          _
      $region24: #{tpu_custom_call.1} parent=5 // pred_fallthru
        _
      %p163 = scmp.le.s32.totalorder 1, %s16
      %p164 = scmp.lt.s32.totalorder %s16, 3
      %p165 = pnand %p163, %p164
      %p166 = pneg %p165
      // Predicated region
      $region29: #{tpu_custom_call.1} parent=5 // pred_check
        _
      $region30: #{tpu_custom_call.1} parent=5 // pred_check_branch
        %168 = sbr.rel (%p165) target = $region32
      $region31: #{tpu_custom_call.1} parent=5 // pred_region
        %s169 = ssub.s32 %s16, 1
        %s170 = sand.u32 %s29, 1
        %s171 = scalar_lea.sflag [#allocation3], %s170
        %s172 = sand.u32 %s29, 1
        %s173 = smul.addr %s172, 8
        %s174 = scalar_lea.vmem [#allocation2], %s173
        // Predicated region
        $region33: #{tpu_custom_call.1} parent=31 // pred_check
          %p175 = pneg %p42
        $region34: #{tpu_custom_call.1} parent=31 // pred_check_branch
          %177 = sbr.rel (%p175) target = $region36
        $region35: #{tpu_custom_call.1} parent=31 // pred_region
          %178 = dma.done %s171, 128
        $region36: #{tpu_custom_call.1} parent=31 // pred_fallthru
          _
        // Predicated region
        $region37: #{tpu_custom_call.1} parent=31 // pred_check
          %p179 = pneg %p63
        $region38: #{tpu_custom_call.1} parent=31 // pred_check_branch
          %181 = sbr.rel (%p179) target = $region40
        $region39: #{tpu_custom_call.1} parent=31 // pred_region
          %182 = dma.done [#allocation6], 512
        $region40: #{tpu_custom_call.1} parent=31 // pred_fallthru
          _
        %s183 = sand.u32 %s29, 1
        %s184 = scalar_lea.sflag [#allocation3], %s183
        %s185 = sand.u32 %s29, 1
        %s186 = smul.addr %s185, 8
        %s187 = scalar_lea.vmem [#allocation2], %s186
        %p188 = pneg %p42
        %p189 = pneg %p39
        %p190 = pneg %p63
        %p191 = pneg %p60
        %p192 = pneg %p84
        %p193 = pneg %p81
        %p194 = pneg %p110
        %p195 = pneg %p107
        %s196 = sand.u32 %s97, 1
        %s197 = scalar_lea.sflag [#allocation4], %s196
        %s198 = sand.u32 %s97, 1
        %s199 = smul.addr %s198, 8
        %s200 = scalar_lea.vmem [#allocation7], %s199
        %v201 = vld [vmem:[%s174] sm:$0xff]
        %v202 = vld [vmem:[#allocation5] sm:$0xff]
        %v203 = vld [vmem:[#allocation5 + $0x8] sm:$0xff]
        %v204 = vld [vmem:[#allocation5 + $0x10] sm:$0xff]
        %v205 = vld [vmem:[#allocation5 + $0x18] sm:$0xff]
        %v206 = vld [vmem:[%s2] sm:$0x1]
        %v208 = vlaneseq
        %v209 = vshrl.u32 %v208, 7
        %v210 = vsub.s32 0, %v209
        %v211 = vrot.slane %v206, %v210
        %vm213 = vcmask 261120
        %v215 = vsel %vm213, %v201, 0
        %217 = vmatprep.subr.mxu0 0.0
        %218 = vmatpush1.msra.mxu0 %v202
        %219 = vmatprep.subr.mxu0 0.0
        %220 = vmatpush1.msra.mxu0 %v203
        %221 = vmatprep.subr.mxu0 0.0
        %222 = vmatpush1.msra.mxu0 %v204
        %223 = vmatprep.subr.mxu0 0.0
        %224 = vmatpush1.msra.mxu0 %v205
        %225 = vmatprep.subr.mxu0 0.0
        %226 = vmatpush1.msra.mxu0 0.0
        %227 = vmatprep.subr.mxu0 0.0
        %228 = vmatpush1.msra.mxu0 0.0
        %229 = vmatprep.subr.mxu0 0.0
        %230 = vmatpush1.msra.mxu0 0.0
        %231 = vmatprep.subr.mxu0 0.0
        %232 = vmatpush1.msra.mxu0 0.0
        %233 = vmatprep.subr.mxu0 0.0
        %234 = vmatpush1.msra.mxu0 0.0
        %235 = vmatprep.subr.mxu0 0.0
        %236 = vmatpush1.msra.mxu0 0.0
        %237 = vmatprep.subr.mxu0 0.0
        %238 = vmatpush1.msra.mxu0 0.0
        %239 = vmatprep.subr.mxu0 0.0
        %240 = vmatpush1.msra.mxu0 0.0
        %241 = vmatprep.subr.mxu0 0.0
        %242 = vmatpush1.msra.mxu0 0.0
        %243 = vmatprep.subr.mxu0 0.0
        %244 = vmatpush1.msra.mxu0 0.0
        %245 = vmatprep.subr.mxu0 0.0
        %246 = vmatpush1.msra.mxu0 0.0
        %247 = vmatprep.subr.mxu0 0.0
        %248 = vmatpush1.msra.mxu0 0.0
        %249 = vmatprep.subr.mxu0 0.0
        %250 = vmatpush1.msra.mxu0 0.0
        %251 = vmatprep.subr.mxu0 0.0
        %252 = vmatpush1.msra.mxu0 0.0
        %253 = vmatprep.subr.mxu0 0.0
        %254 = vmatpush1.msra.mxu0 0.0
        %255 = vmatprep.subr.mxu0 0.0
        %256 = vmatpush1.msra.mxu0 0.0
        %257 = vmatprep.subr.mxu0 0.0
        %258 = vmatpush1.msra.mxu0 0.0
        %259 = vmatprep.subr.mxu0 0.0
        %260 = vmatpush1.msra.mxu0 0.0
        %261 = vmatprep.subr.mxu0 0.0
        %262 = vmatpush1.msra.mxu0 0.0
        %263 = vmatprep.subr.mxu0 0.0
        %264 = vmatpush1.msra.mxu0 0.0
        %265 = vmatprep.subr.mxu0 0.0
        %266 = vmatpush1.msra.mxu0 0.0
        %267 = vmatprep.subr.mxu0 0.0
        %268 = vmatpush1.msra.mxu0 0.0
        %269 = vmatprep.subr.mxu0 0.0
        %270 = vmatpush1.msra.mxu0 0.0
        %271 = vmatprep.subr.mxu0 0.0
        %272 = vmatpush1.msra.mxu0 0.0
        %273 = vmatprep.subr.mxu0 0.0
        %274 = vmatpush1.msra.mxu0 0.0
        %275 = vmatprep.subr.mxu0 0.0
        %276 = vmatpush1.msra.mxu0 0.0
        %277 = vmatprep.subr.mxu0 0.0
        %278 = vmatpush1.msra.mxu0 0.0
        %279 = vmatprep.subr.mxu0 0.0
        %280 = vmatpush1.msra.mxu0 0.0
        %281 = vmatprep.mubr.f32.mxu0 0.0
        %282 = vmatmul.mubr.f32.gmra.mrb[0].mxu0 %v215
        %v283 = vpop.f32.mrb[0].mxu0
        %v284 = vadd.f32 %v211, %v283
        %v285 = vpop.f32.mrb[0].mxu0
        %286 = vdwg.mxu0
        %v287 = vmul.f32 %v284, 0.25
        %289 = vrot.lane.b32.xlu0 %v284, 96
        %v290 = vpop.permute.xlu0 %289
        %vm291 = vcmask 130048
        %v293 = vsel %vm291, %v287, 0
        %v295 = vsel %vm291, %v290, 0
        %297 = vmatprep.subr.mxu0 0.0
        %298 = vmatpush1.xpose.msra.mxu0 %v295
        %299 = vmatprep.subr.mxu0 0.0
        %300 = vmatpush1.xpose.msra.mxu0 0.0
        %301 = vmatprep.subr.mxu0 0.0
        %302 = vmatpush1.xpose.msra.mxu0 0.0
        %303 = vmatprep.subr.mxu0 0.0
        %304 = vmatpush1.xpose.msra.mxu0 0.0
        %305 = vmatprep.subr.mxu0 0.0
        %306 = vmatpush1.xpose.msra.mxu0 0.0
        %307 = vmatprep.subr.mxu0 0.0
        %308 = vmatpush1.xpose.msra.mxu0 0.0
        %309 = vmatprep.subr.mxu0 0.0
        %310 = vmatpush1.xpose.msra.mxu0 0.0
        %311 = vmatprep.subr.mxu0 0.0
        %312 = vmatpush1.xpose.msra.mxu0 0.0
        %313 = vmatprep.subr.mxu0 0.0
        %314 = vmatpush1.xpose.msra.mxu0 0.0
        %315 = vmatprep.subr.mxu0 0.0
        %316 = vmatpush1.xpose.msra.mxu0 0.0
        %317 = vmatprep.subr.mxu0 0.0
        %318 = vmatpush1.xpose.msra.mxu0 0.0
        %319 = vmatprep.subr.mxu0 0.0
        %320 = vmatpush1.xpose.msra.mxu0 0.0
        %321 = vmatprep.subr.mxu0 0.0
        %322 = vmatpush1.xpose.msra.mxu0 0.0
        %323 = vmatprep.subr.mxu0 0.0
        %324 = vmatpush1.xpose.msra.mxu0 0.0
        %325 = vmatprep.subr.mxu0 0.0
        %326 = vmatpush1.xpose.msra.mxu0 0.0
        %327 = vmatprep.subr.mxu0 0.0
        %328 = vmatpush1.xpose.msra.mxu0 0.0
        %329 = vmatprep.subr.mxu0 0.0
        %330 = vmatpush1.xpose.msra.mxu0 0.0
        %331 = vmatprep.subr.mxu0 0.0
        %332 = vmatpush1.xpose.msra.mxu0 0.0
        %333 = vmatprep.subr.mxu0 0.0
        %334 = vmatpush1.xpose.msra.mxu0 0.0
        %335 = vmatprep.subr.mxu0 0.0
        %336 = vmatpush1.xpose.msra.mxu0 0.0
        %337 = vmatprep.subr.mxu0 0.0
        %338 = vmatpush1.xpose.msra.mxu0 0.0
        %339 = vmatprep.subr.mxu0 0.0
        %340 = vmatpush1.xpose.msra.mxu0 0.0
        %341 = vmatprep.subr.mxu0 0.0
        %342 = vmatpush1.xpose.msra.mxu0 0.0
        %343 = vmatprep.subr.mxu0 0.0
        %344 = vmatpush1.xpose.msra.mxu0 0.0
        %345 = vmatprep.subr.mxu0 0.0
        %346 = vmatpush1.xpose.msra.mxu0 0.0
        %347 = vmatprep.subr.mxu0 0.0
        %348 = vmatpush1.xpose.msra.mxu0 0.0
        %349 = vmatprep.subr.mxu0 0.0
        %350 = vmatpush1.xpose.msra.mxu0 0.0
        %351 = vmatprep.subr.mxu0 0.0
        %352 = vmatpush1.xpose.msra.mxu0 0.0
        %353 = vmatprep.subr.mxu0 0.0
        %354 = vmatpush1.xpose.msra.mxu0 0.0
        %355 = vmatprep.subr.mxu0 0.0
        %356 = vmatpush1.xpose.msra.mxu0 0.0
        %357 = vmatprep.subr.mxu0 0.0
        %358 = vmatpush1.xpose.msra.mxu0 0.0
        %359 = vmatprep.subr.mxu0 0.0
        %360 = vmatpush1.xpose.msra.mxu0 0.0
        %361 = vmatprep.mubr.f32.mxu0 0.0
        %362 = vmatmul.mubr.f32.gmra.mrb[0].mxu0 %v293
        %v363 = vpop.f32.mrb[0].mxu0
        %v364 = vadd.f32 0.0, %v363
        %v365 = vpop.f32.mrb[0].mxu0
        %366 = vdwg.mxu0
        %vm367 = vcmask 64512
        %v368 = vsel %vm367, %v364, -inf
        %369 = vmax.xlane.f32.xlu0 %v368
        %v370 = vpop.xlane.xlu0 %369
        %v371 = vsub.f32 %v364, %v370
        %v372 = vmul.f32 %v371, 1.442695
        %v373 = vpow.pop %v372
        %v374 = vsel %vm367, %v373, 0.0
        %375 = vadd.xlane.f32.xlu0 %v374
        %v376 = vpop.xlane.xlu0 %375
        %v377 = vrcp.pop %v376
        %v378 = vmul.f32 %v373, %v377
        %379 = vrot.lane.b32.xlu0 %v284, 64
        %v380 = vpop.permute.xlu0 %379
        %v383 = vsel %vm367, %v378, 0
        %385 = vmatprep.subr.mxu0 0.0
        %386 = vmatpush1.msra.mxu0 %v380
        %387 = vmatprep.subr.mxu0 0.0
        %388 = vmatpush1.msra.mxu0 0.0
        %389 = vmatprep.subr.mxu0 0.0
        %390 = vmatpush1.msra.mxu0 0.0
        %391 = vmatprep.subr.mxu0 0.0
        %392 = vmatpush1.msra.mxu0 0.0
        %393 = vmatprep.subr.mxu0 0.0
        %394 = vmatpush1.msra.mxu0 0.0
        %395 = vmatprep.subr.mxu0 0.0
        %396 = vmatpush1.msra.mxu0 0.0
        %397 = vmatprep.subr.mxu0 0.0
        %398 = vmatpush1.msra.mxu0 0.0
        %399 = vmatprep.subr.mxu0 0.0
        %400 = vmatpush1.msra.mxu0 0.0
        %401 = vmatprep.subr.mxu0 0.0
        %402 = vmatpush1.msra.mxu0 0.0
        %403 = vmatprep.subr.mxu0 0.0
        %404 = vmatpush1.msra.mxu0 0.0
        %405 = vmatprep.subr.mxu0 0.0
        %406 = vmatpush1.msra.mxu0 0.0
        %407 = vmatprep.subr.mxu0 0.0
        %408 = vmatpush1.msra.mxu0 0.0
        %409 = vmatprep.subr.mxu0 0.0
        %410 = vmatpush1.msra.mxu0 0.0
        %411 = vmatprep.subr.mxu0 0.0
        %412 = vmatpush1.msra.mxu0 0.0
        %413 = vmatprep.subr.mxu0 0.0
        %414 = vmatpush1.msra.mxu0 0.0
        %415 = vmatprep.subr.mxu0 0.0
        %416 = vmatpush1.msra.mxu0 0.0
        %417 = vmatprep.subr.mxu0 0.0
        %418 = vmatpush1.msra.mxu0 0.0
        %419 = vmatprep.subr.mxu0 0.0
        %420 = vmatpush1.msra.mxu0 0.0
        %421 = vmatprep.subr.mxu0 0.0
        %422 = vmatpush1.msra.mxu0 0.0
        %423 = vmatprep.subr.mxu0 0.0
        %424 = vmatpush1.msra.mxu0 0.0
        %425 = vmatprep.subr.mxu0 0.0
        %426 = vmatpush1.msra.mxu0 0.0
        %427 = vmatprep.subr.mxu0 0.0
        %428 = vmatpush1.msra.mxu0 0.0
        %429 = vmatprep.subr.mxu0 0.0
        %430 = vmatpush1.msra.mxu0 0.0
        %431 = vmatprep.subr.mxu0 0.0
        %432 = vmatpush1.msra.mxu0 0.0
        %433 = vmatprep.subr.mxu0 0.0
        %434 = vmatpush1.msra.mxu0 0.0
        %435 = vmatprep.subr.mxu0 0.0
        %436 = vmatpush1.msra.mxu0 0.0
        %437 = vmatprep.subr.mxu0 0.0
        %438 = vmatpush1.msra.mxu0 0.0
        %439 = vmatprep.subr.mxu0 0.0
        %440 = vmatpush1.msra.mxu0 0.0
        %441 = vmatprep.subr.mxu0 0.0
        %442 = vmatpush1.msra.mxu0 0.0
        %443 = vmatprep.subr.mxu0 0.0
        %444 = vmatpush1.msra.mxu0 0.0
        %445 = vmatprep.subr.mxu0 0.0
        %446 = vmatpush1.msra.mxu0 0.0
        %447 = vmatprep.subr.mxu0 0.0
        %448 = vmatpush1.msra.mxu0 0.0
        %449 = vmatprep.mubr.f32.mxu0 0.0
        %450 = vmatmul.mubr.f32.gmra.mrb[0].mxu0 %v383
        %v451 = vpop.f32.mrb[0].mxu0
        %v452 = vadd.f32 0.0, %v451
        %v453 = vpop.f32.mrb[0].mxu0
        %454 = vdwg.mxu0
        %455 = vrot.lane.b32.xlu0 %v287, 112
        %v456 = vpop.permute.xlu0 %455
        %457 = vrot.lane.b32.xlu0 %v284, 80
        %v458 = vpop.permute.xlu0 %457
        %v459 = vsel %vm291, %v456, 0
        %v461 = vsel %vm291, %v458, 0
        %463 = vmatprep.subr.mxu0 0.0
        %464 = vmatpush1.xpose.msra.mxu0 %v461
        %465 = vmatprep.subr.mxu0 0.0
        %466 = vmatpush1.xpose.msra.mxu0 0.0
        %467 = vmatprep.subr.mxu0 0.0
        %468 = vmatpush1.xpose.msra.mxu0 0.0
        %469 = vmatprep.subr.mxu0 0.0
        %470 = vmatpush1.xpose.msra.mxu0 0.0
        %471 = vmatprep.subr.mxu0 0.0
        %472 = vmatpush1.xpose.msra.mxu0 0.0
        %473 = vmatprep.subr.mxu0 0.0
        %474 = vmatpush1.xpose.msra.mxu0 0.0
        %475 = vmatprep.subr.mxu0 0.0
        %476 = vmatpush1.xpose.msra.mxu0 0.0
        %477 = vmatprep.subr.mxu0 0.0
        %478 = vmatpush1.xpose.msra.mxu0 0.0
        %479 = vmatprep.subr.mxu0 0.0
        %480 = vmatpush1.xpose.msra.mxu0 0.0
        %481 = vmatprep.subr.mxu0 0.0
        %482 = vmatpush1.xpose.msra.mxu0 0.0
        %483 = vmatprep.subr.mxu0 0.0
        %484 = vmatpush1.xpose.msra.mxu0 0.0
        %485 = vmatprep.subr.mxu0 0.0
        %486 = vmatpush1.xpose.msra.mxu0 0.0
        %487 = vmatprep.subr.mxu0 0.0
        %488 = vmatpush1.xpose.msra.mxu0 0.0
        %489 = vmatprep.subr.mxu0 0.0
        %490 = vmatpush1.xpose.msra.mxu0 0.0
        %491 = vmatprep.subr.mxu0 0.0
        %492 = vmatpush1.xpose.msra.mxu0 0.0
        %493 = vmatprep.subr.mxu0 0.0
        %494 = vmatpush1.xpose.msra.mxu0 0.0
        %495 = vmatprep.subr.mxu0 0.0
        %496 = vmatpush1.xpose.msra.mxu0 0.0
        %497 = vmatprep.subr.mxu0 0.0
        %498 = vmatpush1.xpose.msra.mxu0 0.0
        %499 = vmatprep.subr.mxu0 0.0
        %500 = vmatpush1.xpose.msra.mxu0 0.0
        %501 = vmatprep.subr.mxu0 0.0
        %502 = vmatpush1.xpose.msra.mxu0 0.0
        %503 = vmatprep.subr.mxu0 0.0
        %504 = vmatpush1.xpose.msra.mxu0 0.0
        %505 = vmatprep.subr.mxu0 0.0
        %506 = vmatpush1.xpose.msra.mxu0 0.0
        %507 = vmatprep.subr.mxu0 0.0
        %508 = vmatpush1.xpose.msra.mxu0 0.0
        %509 = vmatprep.subr.mxu0 0.0
        %510 = vmatpush1.xpose.msra.mxu0 0.0
        %511 = vmatprep.subr.mxu0 0.0
        %512 = vmatpush1.xpose.msra.mxu0 0.0
        %513 = vmatprep.subr.mxu0 0.0
        %514 = vmatpush1.xpose.msra.mxu0 0.0
        %515 = vmatprep.subr.mxu0 0.0
        %516 = vmatpush1.xpose.msra.mxu0 0.0
        %517 = vmatprep.subr.mxu0 0.0
        %518 = vmatpush1.xpose.msra.mxu0 0.0
        %519 = vmatprep.subr.mxu0 0.0
        %520 = vmatpush1.xpose.msra.mxu0 0.0
        %521 = vmatprep.subr.mxu0 0.0
        %522 = vmatpush1.xpose.msra.mxu0 0.0
        %523 = vmatprep.subr.mxu0 0.0
        %524 = vmatpush1.xpose.msra.mxu0 0.0
        %525 = vmatprep.subr.mxu0 0.0
        %526 = vmatpush1.xpose.msra.mxu0 0.0
        %527 = vmatprep.mubr.f32.mxu0 0.0
        %528 = vmatmul.mubr.f32.gmra.mrb[0].mxu0 %v459
        %v529 = vpop.f32.mrb[0].mxu0
        %v530 = vadd.f32 0.0, %v529
        %v531 = vpop.f32.mrb[0].mxu0
        %532 = vdwg.mxu0
        %v533 = vsel %vm367, %v530, -inf
        %534 = vmax.xlane.f32.xlu0 %v533
        %v535 = vpop.xlane.xlu0 %534
        %v536 = vsub.f32 %v530, %v535
        %v537 = vmul.f32 %v536, 1.442695
        %v538 = vpow.pop %v537
        %v539 = vsel %vm367, %v538, 0.0
        %540 = vadd.xlane.f32.xlu0 %v539
        %v541 = vpop.xlane.xlu0 %540
        %v542 = vrcp.pop %v541
        %v543 = vmul.f32 %v538, %v542
        %544 = vrot.lane.b32.xlu0 %v284, 48
        %v545 = vpop.permute.xlu0 %544
        %v548 = vsel %vm367, %v543, 0
        %550 = vmatprep.subr.mxu0 0.0
        %551 = vmatpush1.msra.mxu0 %v545
        %552 = vmatprep.subr.mxu0 0.0
        %553 = vmatpush1.msra.mxu0 0.0
        %554 = vmatprep.subr.mxu0 0.0
        %555 = vmatpush1.msra.mxu0 0.0
        %556 = vmatprep.subr.mxu0 0.0
        %557 = vmatpush1.msra.mxu0 0.0
        %558 = vmatprep.subr.mxu0 0.0
        %559 = vmatpush1.msra.mxu0 0.0
        %560 = vmatprep.subr.mxu0 0.0
        %561 = vmatpush1.msra.mxu0 0.0
        %562 = vmatprep.subr.mxu0 0.0
        %563 = vmatpush1.msra.mxu0 0.0
        %564 = vmatprep.subr.mxu0 0.0
        %565 = vmatpush1.msra.mxu0 0.0
        %566 = vmatprep.subr.mxu0 0.0
        %567 = vmatpush1.msra.mxu0 0.0
        %568 = vmatprep.subr.mxu0 0.0
        %569 = vmatpush1.msra.mxu0 0.0
        %570 = vmatprep.subr.mxu0 0.0
        %571 = vmatpush1.msra.mxu0 0.0
        %572 = vmatprep.subr.mxu0 0.0
        %573 = vmatpush1.msra.mxu0 0.0
        %574 = vmatprep.subr.mxu0 0.0
        %575 = vmatpush1.msra.mxu0 0.0
        %576 = vmatprep.subr.mxu0 0.0
        %577 = vmatpush1.msra.mxu0 0.0
        %578 = vmatprep.subr.mxu0 0.0
        %579 = vmatpush1.msra.mxu0 0.0
        %580 = vmatprep.subr.mxu0 0.0
        %581 = vmatpush1.msra.mxu0 0.0
        %582 = vmatprep.subr.mxu0 0.0
        %583 = vmatpush1.msra.mxu0 0.0
        %584 = vmatprep.subr.mxu0 0.0
        %585 = vmatpush1.msra.mxu0 0.0
        %586 = vmatprep.subr.mxu0 0.0
        %587 = vmatpush1.msra.mxu0 0.0
        %588 = vmatprep.subr.mxu0 0.0
        %589 = vmatpush1.msra.mxu0 0.0
        %590 = vmatprep.subr.mxu0 0.0
        %591 = vmatpush1.msra.mxu0 0.0
        %592 = vmatprep.subr.mxu0 0.0
        %593 = vmatpush1.msra.mxu0 0.0
        %594 = vmatprep.subr.mxu0 0.0
        %595 = vmatpush1.msra.mxu0 0.0
        %596 = vmatprep.subr.mxu0 0.0
        %597 = vmatpush1.msra.mxu0 0.0
        %598 = vmatprep.subr.mxu0 0.0
        %599 = vmatpush1.msra.mxu0 0.0
        %600 = vmatprep.subr.mxu0 0.0
        %601 = vmatpush1.msra.mxu0 0.0
        %602 = vmatprep.subr.mxu0 0.0
        %603 = vmatpush1.msra.mxu0 0.0
        %604 = vmatprep.subr.mxu0 0.0
        %605 = vmatpush1.msra.mxu0 0.0
        %606 = vmatprep.subr.mxu0 0.0
        %607 = vmatpush1.msra.mxu0 0.0
        %608 = vmatprep.subr.mxu0 0.0
        %609 = vmatpush1.msra.mxu0 0.0
        %610 = vmatprep.subr.mxu0 0.0
        %611 = vmatpush1.msra.mxu0 0.0
        %612 = vmatprep.subr.mxu0 0.0
        %613 = vmatpush1.msra.mxu0 0.0
        %614 = vmatprep.mubr.f32.mxu0 0.0
        %615 = vmatmul.mubr.f32.gmra.mrb[0].mxu0 %v548
        %v616 = vpop.f32.mrb[0].mxu0
        %v617 = vadd.f32 0.0, %v616
        %v618 = vpop.f32.mrb[0].mxu0
        %619 = vdwg.mxu0
        %621 = vrot.lane.b32.xlu0 %v617, 16
        %v622 = vpop.permute.xlu0 %621
        %v624 = vsel %vm291, %v452, %v622
        %625 = vst.msk [vmem:[%s200] sm:$0xff] %vm213, %v624
        %s626 = sand.u32 %s97, 1
        %s627 = scalar_lea.sflag [#allocation4], %s626
        %s628 = sand.u32 %s97, 1
        %s629 = smul.addr %s628, 8
        %s630 = scalar_lea.vmem [#allocation7], %s629
        // Predicated region
        $region41: #{tpu_custom_call.1} parent=31 // pred_check
          %p631 = pneg %p107
        $region42: #{tpu_custom_call.1} parent=31 // pred_check_branch
          %633 = sbr.rel (%p631) target = $region44
        $region43: #{tpu_custom_call.1} parent=31 // pred_region
          %s635 = ssub.s32 128, 128
          %636 = vsyncadd %s627, %s635
          %s637 = smul.addr %s21, 128
          %s638 = scalar_lea.hbm %s3, %s637
          %s640 = sshll.u32 %s630, 4
          %s641 = int_to_ptr.vmem [resolvable:$true] %s640
          %643 = dma.vmem_to_hbm [thread:$0]  %s641, 128, %s638, %s627
        $region44: #{tpu_custom_call.1} parent=31 // pred_fallthru
          _
      $region32: #{tpu_custom_call.1} parent=5 // pred_fallthru
        _
      %p644 = scmp.le.s32.totalorder 2, %s16
      // Predicated region
      $region45: #{tpu_custom_call.1} parent=5 // pred_check
        %p645 = pneg %p644
      $region46: #{tpu_custom_call.1} parent=5 // pred_check_branch
        %647 = sbr.rel (%p645) target = $region48
      $region47: #{tpu_custom_call.1} parent=5 // pred_region
        %s648 = ssub.s32 %s16, 2
        // Predicated region
        $region49: #{tpu_custom_call.1} parent=47 // pred_check
          %p649 = pneg %p113
        $region50: #{tpu_custom_call.1} parent=47 // pred_check_branch
          %651 = sbr.rel (%p649) target = $region52
        $region51: #{tpu_custom_call.1} parent=47 // pred_region
          %s652 = sand.u32 %s98, 1
          %s653 = scalar_lea.sflag [#allocation4], %s652
          %s654 = sand.u32 %s98, 1
          %s655 = smul.addr %s654, 8
          %s656 = scalar_lea.vmem [#allocation7], %s655
          %657 = dma.done %s653, 128
        $region52: #{tpu_custom_call.1} parent=47 // pred_fallthru
          _
      $region48: #{tpu_custom_call.1} parent=5 // pred_fallthru
        _
    $region6: #{tpu_custom_call.1} parent=1 // loop_footer
      %s20 = sadd.s32 1, %s16
    $region7: #{tpu_custom_call.1} parent=1 // loop_footer_branch
      %15 = sbr.rel target = $region3
    $region8: #{tpu_custom_call.1} parent=1 // loop_exit
      _
    %658 = vsyncpa [#allocation3], 1
    %s659 = scalar_lea.sflag [#allocation3], 1
    %660 = vsyncpa %s659, 1
    %661 = vsyncpa [#allocation6], 1
    %662 = vsyncpa [#allocation4], 1
    %s663 = scalar_lea.sflag [#allocation4], 1
    %664 = vsyncpa %s663, 1

</llo_original>
